<compile_context>
chip_gen: v7x
topology: tpu7x:2x2x1
jax: 0.10.0
libtpu: 0.0.40
codegen_flags: <defaults>
</compile_context>

<pallas_src>
import jax
import jax.numpy as jnp
from jax.experimental import pallas as pl
from jax.experimental.pallas import tpu as pltpu

_NEG_BIG = -1.0e30  # finite "-inf" so padded vocab lanes never create NaNs


def _round_up(x, m):
    return ((x + m - 1) // m) * m


def _generator_kernel(x_ref, wt_ref, b_ref, out_ref, m_ref, l_ref):
    # x_ref:   (tm, d_model)  token tile (fetched once per token tile)
    # wt_ref:  (d_model, tn)  streamed slab of the transposed projection weight
    # b_ref:   (1, tn)        bias slab (f32; padded lanes = -1e30)
    # out_ref: (tm, tn)       log-prob tile (written only during sweep 1)
    # m_ref/l_ref: (tm, 1) f32 scratch - running max / rescaled sum-exp
    sweep = pl.program_id(1)  # 0 = reduction sweep, 1 = write sweep
    j = pl.program_id(2)      # vocab tile index

    @pl.when((sweep == 0) & (j == 0))
    def _init():
        m_ref[...] = jnp.full_like(m_ref, _NEG_BIG)
        l_ref[...] = jnp.zeros_like(l_ref)

    # MXU matmul (bf16 or f32 operands), f32 accumulate; softmax math in f32.
    logits = jnp.dot(x_ref[...], wt_ref[...], preferred_element_type=jnp.float32)
    logits = logits + b_ref[...]

    @pl.when(sweep == 0)
    def _reduce():
        m_prev = m_ref[...]
        m_new = jnp.maximum(m_prev, jnp.max(logits, axis=-1, keepdims=True))
        scale = jnp.exp(m_prev - m_new)
        l_ref[...] = l_ref[...] * scale + jnp.sum(
            jnp.exp(logits - m_new), axis=-1, keepdims=True)
        m_ref[...] = m_new

    @pl.when(sweep == 1)
    def _write():
        lse = m_ref[...] + jnp.log(l_ref[...])
        out_ref[...] = (logits - lse).astype(out_ref.dtype)


def prepare_generator_params(weight, bias, compute_dtype=jnp.bfloat16):
    """One-time parameter prep (do at init, not per forward call).

    nn.Linear stores weight as (vocab, d_model); the kernel consumes it
    pre-transposed as (d_model, vocab) in the MXU compute dtype, so the
    per-call HBM round-trip of a full-weight transpose is eliminated.
    """
    return weight.T.astype(compute_dtype), bias.astype(jnp.float32)


def generator_forward(x, weight_t, bias, *, block_tokens=256, block_vocab=1024,
                      out_dtype=None):
    """log_softmax(x @ weight_t + bias, axis=-1).

    x:        (batch, seq, d_model)
    weight_t: (d_model, vocab), pre-transposed, in the MXU compute dtype
    bias:     (vocab,) float32
    block_tokens: token tile (use 256 on v6e/v7x, 128 on v5e)
    block_vocab:  vocab tile (multiple of 128/256; ~1024-2048 typical,
                  ~512 on v5e)
    out_dtype: output dtype (defaults to x.dtype; bf16 halves the dominant
               HBM writeback if the consumer tolerates it)
    """
    batch, seq, d_model = x.shape
    dm2, vocab = weight_t.shape
    assert dm2 == d_model, "weight_t must be (d_model, vocab)"
    compute_dtype = weight_t.dtype
    out_dtype = x.dtype if out_dtype is None else out_dtype

    n = batch * seq
    # Token tile: multiple of 8 sublanes, capped at the (padded) token count.
    tm = min(_round_up(block_tokens, 8), _round_up(n, 8))
    n_pad = _round_up(n, tm)
    # Vocab tile: multiple of 128 lanes; pad the vocab to a whole number of tiles.
    tn = min(_round_up(block_vocab, 128), _round_up(vocab, 128))
    vocab_pad = _round_up(vocab, tn)

    x_flat = x.reshape(n, d_model).astype(compute_dtype)
    if n_pad != n:
        # Zero token rows -> logits == bias -> finite log_softmax; sliced off below.
        x_flat = jnp.pad(x_flat, ((0, n_pad - n), (0, 0)))

    wt = weight_t
    if vocab_pad != vocab:
        wt = jnp.pad(wt, ((0, 0), (0, vocab_pad - vocab)))
    b2 = bias.reshape(1, vocab).astype(jnp.float32)
    if vocab_pad != vocab:
        # Padded vocab entries get -1e30 so exp() == 0 and max() is unaffected.
        b2 = jnp.pad(b2, ((0, 0), (0, vocab_pad - vocab)),
                     constant_values=_NEG_BIG)

    n_tiles = n_pad // tm
    v_tiles = vocab_pad // tn
    grid = (n_tiles, 2, v_tiles)  # (token tile, sweep, vocab tile)

    # VMEM budget from actual (double-buffered) tile sizes, with margin;
    # capped below v7x's 64 MiB physical VMEM.
    csz = jnp.dtype(compute_dtype).itemsize
    osz = jnp.dtype(out_dtype).itemsize
    vmem_need = (2 * tm * d_model * csz      # x tile
                 + 2 * d_model * tn * csz    # weight slab
                 + 2 * 8 * tn * 4            # bias slab (sublane padded)
                 + 2 * tm * tn * osz         # out tile
                 + 2 * tm * 128 * 4)         # m/l scratch (lane padded)
    vmem_limit = int(min(max(2 * vmem_need + (4 << 20), 16 << 20), 56 << 20))

    cost = pl.CostEstimate(
        flops=2 * 2 * n_pad * d_model * vocab_pad,       # two sweeps recompute
        transcendentals=2 * n_pad * vocab_pad,           # exp (+ log) chain
        bytes_accessed=(n_pad * d_model * csz
                        + 2 * d_model * vocab_pad * csz  # weight streamed twice
                        + n_pad * vocab_pad * osz
                        + 4 * vocab_pad),
    )

    out_flat = pl.pallas_call(
        _generator_kernel,
        grid_spec=pltpu.PrefetchScalarGridSpec(
            num_scalar_prefetch=0,
            grid=grid,
            in_specs=[
                # x tile: constant across (sweep, vocab) -> DMA'd once per token tile.
                pl.BlockSpec((tm, d_model), lambda i, s, j: (i, 0)),
                # Weight slab streamed over the vocab axis (double-buffered).
                pl.BlockSpec((d_model, tn), lambda i, s, j: (0, j)),
                pl.BlockSpec((1, tn), lambda i, s, j: (0, j)),
            ],
            # During sweep 0 the output block index is pinned to (i, 0) so the
            # only writebacks are of tiles written during sweep 1 (all block
            # revisits are consecutive, no garbage stores).
            out_specs=pl.BlockSpec((tm, tn), lambda i, s, j: (i, s * j)),
            scratch_shapes=[pltpu.VMEM((tm, 1), jnp.float32),   # running max
                            pltpu.VMEM((tm, 1), jnp.float32)],  # running sum-exp
        ),
        out_shape=jax.ShapeDtypeStruct((n_pad, vocab_pad), out_dtype),
        compiler_params=pltpu.CompilerParams(
            dimension_semantics=("parallel", "arbitrary", "arbitrary"),
            vmem_limit_bytes=vmem_limit,
        ),
        cost_estimate=cost,
    )(x_flat, wt, b2)

    return out_flat[:n, :vocab].reshape(batch, seq, vocab)


if __name__ == "__main__":
    key = jax.random.PRNGKey(0)
    k_w, k_b, k_x = jax.random.split(key, 3)

    # Small shapes implied by the module: hidden d_model, vocab, (batch, seq).
    d_model, vocab = 32, 16
    batch, seq = 2, 8

    # Deterministic "parameters" (nn.Linear weight/bias) and inputs.
    weight = jax.random.normal(k_w, (vocab, d_model), dtype=jnp.float32) * 0.1
    bias = jax.random.normal(k_b, (vocab,), dtype=jnp.float32) * 0.1
    x = jax.random.normal(k_x, (batch, seq, d_model), dtype=jnp.float32)

    # Reference (plain JAX, f32) of the PyTorch forward semantics.
    ref = jax.nn.log_softmax(jnp.einsum("bsd,vd->bsv", x, weight) + bias, axis=-1)

    # f32-operand path: tight check against the f32 reference.
    wt32, b32 = prepare_generator_params(weight, bias, compute_dtype=jnp.float32)
    out32 = jax.block_until_ready(generator_forward(x, wt32, b32))
    assert out32.shape == (batch, seq, vocab)
    assert jnp.allclose(out32, ref, atol=1e-5, rtol=1e-5)

    # bf16-operand production path (f32 accumulate + f32 softmax): loose check.
    wtbf, bbf = prepare_generator_params(weight, bias, compute_dtype=jnp.bfloat16)
    outbf = jax.block_until_ready(generator_forward(x, wtbf, bbf))
    assert outbf.shape == (batch, seq, vocab)
    assert jnp.allclose(outbf, ref, atol=3e-2, rtol=3e-2)

    print("KERNEL_OK")
</pallas_src>

<mosaic_0001>
module attributes {stable_mosaic.version = 11 : i64} {
  func.func @_generator_kernel(%arg0: i32, %arg1: i32, %arg2: i32, %arg3: memref<16x32xf32, #tpu.memory_space<vmem>>, %arg4: memref<32x128xf32, #tpu.memory_space<vmem>>, %arg5: memref<1x128xf32, #tpu.memory_space<vmem>>, %arg6: memref<16x128xf32, #tpu.memory_space<vmem>>, %arg7: memref<16x1xf32, #tpu.memory_space<vmem>>, %arg8: memref<16x1xf32, #tpu.memory_space<vmem>>) attributes {dimension_semantics = [#tpu.dimension_semantics<parallel>, #tpu.dimension_semantics<arbitrary>, #tpu.dimension_semantics<arbitrary>], iteration_bounds = array<i64: 1, 2, 1>, scalar_prefetch = 0 : i64, scratch_operands = 2 : i64, tpu.core_type = #tpu.core_type<tc>, window_params = [{transform_indices = @transform_0, window_bounds = array<i64: 16, 32>}, {transform_indices = @transform_1, window_bounds = array<i64: 32, 128>}, {transform_indices = @transform_2, window_bounds = array<i64: 1, 128>}, {transform_indices = @transform_3, window_bounds = array<i64: 16, 128>}]} {
    %c0_i32 = arith.constant 0 : i32
    %0 = arith.cmpi eq, %arg1, %c0_i32 : i32
    %c0_i32_0 = arith.constant 0 : i32
    %1 = arith.cmpi eq, %arg2, %c0_i32_0 : i32
    %2 = arith.andi %0, %1 : i1
    %3 = arith.extui %2 : i1 to i32
    %c0_i32_1 = arith.constant 0 : i32
    %4 = arith.cmpi ne, %3, %c0_i32_1 : i32
    scf.if %4 {
      %cst_10 = arith.constant -1.000000e+30 : f32
      %17 = vector.broadcast %cst_10 : f32 to vector<16x1xf32>
      %c0_11 = arith.constant 0 : index
      %c0_12 = arith.constant 0 : index
      %18 = vector.load %arg7[%c0_11, %c0_12] : memref<16x1xf32, #tpu.memory_space<vmem>>, vector<16x1xf32>
      tpu.vector_store %arg7[%c0_11, %c0_12], %17 {strides = array<i32>} : memref<16x1xf32, #tpu.memory_space<vmem>>, vector<16x1xf32>,
      %cst_13 = arith.constant 0.000000e+00 : f32
      %19 = vector.broadcast %cst_13 : f32 to vector<16x1xf32>
      %c0_14 = arith.constant 0 : index
      %c0_15 = arith.constant 0 : index
      %20 = vector.load %arg8[%c0_14, %c0_15] : memref<16x1xf32, #tpu.memory_space<vmem>>, vector<16x1xf32>
      tpu.vector_store %arg8[%c0_14, %c0_15], %19 {strides = array<i32>} : memref<16x1xf32, #tpu.memory_space<vmem>>, vector<16x1xf32>,
    } else {
    }
    %c0 = arith.constant 0 : index
    %c0_2 = arith.constant 0 : index
    %5 = vector.load %arg3[%c0, %c0_2] : memref<16x32xf32, #tpu.memory_space<vmem>>, vector<16x32xf32>
    %c0_3 = arith.constant 0 : index
    %c0_4 = arith.constant 0 : index
    %6 = vector.load %arg4[%c0_3, %c0_4] : memref<32x128xf32, #tpu.memory_space<vmem>>, vector<32x128xf32>
    %cst = arith.constant dense<0.000000e+00> : vector<16x128xf32>
    %7 = tpu.matmul %5, %6, %cst {dimension_numbers = #tpu.dot_dimension_numbers<[1], [0], [0], [1], [0, 0, 1, 1], [], []>} : vector<16x32xf32>, vector<32x128xf32>, vector<16x128xf32> -> vector<16x128xf32>
    %c0_5 = arith.constant 0 : index
    %c0_6 = arith.constant 0 : index
    %8 = vector.load %arg5[%c0_5, %c0_6] : memref<1x128xf32, #tpu.memory_space<vmem>>, vector<1x128xf32>
    %9 = vector.broadcast %8 : vector<1x128xf32> to vector<16x128xf32>
    %10 = arith.addf %7, %9 : vector<16x128xf32>
    %c0_i32_7 = arith.constant 0 : i32
    %11 = arith.cmpi eq, %arg1, %c0_i32_7 : i32
    %12 = arith.extui %11 : i1 to i32
    %c0_i32_8 = arith.constant 0 : i32
    %13 = arith.cmpi ne, %12, %c0_i32_8 : i32
    scf.if %13 {
      %c0_10 = arith.constant 0 : index
      %c0_11 = arith.constant 0 : index
      %17 = vector.load %arg7[%c0_10, %c0_11] : memref<16x1xf32, #tpu.memory_space<vmem>>, vector<16x1xf32>
      %cst_12 = arith.constant dense<0xFF800000> : vector<16xf32>
      %18 = vector.multi_reduction <maximumf>, %10, %cst_12 [1] : vector<16x128xf32> to vector<16xf32>
      %19 = vector.shape_cast %18 : vector<16xf32> to vector<16x1xf32>
      %20 = arith.maximumf %17, %19 : vector<16x1xf32>
      %21 = arith.subf %17, %20 : vector<16x1xf32>
      %22 = math.exp %21 : vector<16x1xf32>
      %c0_13 = arith.constant 0 : index
      %c0_14 = arith.constant 0 : index
      %23 = vector.load %arg8[%c0_13, %c0_14] : memref<16x1xf32, #tpu.memory_space<vmem>>, vector<16x1xf32>
      %24 = arith.mulf %23, %22 : vector<16x1xf32>
      %25 = vector.broadcast %20 : vector<16x1xf32> to vector<16x128xf32>
      %26 = arith.subf %10, %25 : vector<16x128xf32>
      %27 = math.exp %26 : vector<16x128xf32>
      %cst_15 = arith.constant dense<0.000000e+00> : vector<16xf32>
      %28 = vector.multi_reduction <add>, %27, %cst_15 [1] : vector<16x128xf32> to vector<16xf32>
      %29 = vector.shape_cast %28 : vector<16xf32> to vector<16x1xf32>
      %30 = arith.addf %24, %29 : vector<16x1xf32>
      %c0_16 = arith.constant 0 : index
      %c0_17 = arith.constant 0 : index
      %31 = vector.load %arg8[%c0_16, %c0_17] : memref<16x1xf32, #tpu.memory_space<vmem>>, vector<16x1xf32>
      tpu.vector_store %arg8[%c0_16, %c0_17], %30 {strides = array<i32>} : memref<16x1xf32, #tpu.memory_space<vmem>>, vector<16x1xf32>,
      %c0_18 = arith.constant 0 : index
      %c0_19 = arith.constant 0 : index
      %32 = vector.load %arg7[%c0_18, %c0_19] : memref<16x1xf32, #tpu.memory_space<vmem>>, vector<16x1xf32>
      tpu.vector_store %arg7[%c0_18, %c0_19], %20 {strides = array<i32>} : memref<16x1xf32, #tpu.memory_space<vmem>>, vector<16x1xf32>,
    } else {
    }
    %c1_i32 = arith.constant 1 : i32
    %14 = arith.cmpi eq, %arg1, %c1_i32 : i32
    %15 = arith.extui %14 : i1 to i32
    %c0_i32_9 = arith.constant 0 : i32
    %16 = arith.cmpi ne, %15, %c0_i32_9 : i32
    scf.if %16 {
      %c0_10 = arith.constant 0 : index
      %c0_11 = arith.constant 0 : index
      %17 = vector.load %arg7[%c0_10, %c0_11] : memref<16x1xf32, #tpu.memory_space<vmem>>, vector<16x1xf32>
      %c0_12 = arith.constant 0 : index
      %c0_13 = arith.constant 0 : index
      %18 = vector.load %arg8[%c0_12, %c0_13] : memref<16x1xf32, #tpu.memory_space<vmem>>, vector<16x1xf32>
      %19 = math.log %18 : vector<16x1xf32>
      %20 = arith.addf %17, %19 : vector<16x1xf32>
      %21 = vector.broadcast %20 : vector<16x1xf32> to vector<16x128xf32>
      %22 = arith.subf %10, %21 : vector<16x128xf32>
      %c0_14 = arith.constant 0 : index
      %c0_15 = arith.constant 0 : index
      %23 = vector.load %arg6[%c0_14, %c0_15] : memref<16x128xf32, #tpu.memory_space<vmem>>, vector<16x128xf32>
      tpu.vector_store %arg6[%c0_14, %c0_15], %22 {strides = array<i32>} : memref<16x128xf32, #tpu.memory_space<vmem>>, vector<16x128xf32>,
    } else {
    }
    return
  }
  func.func @transform_0(%arg0: i32, %arg1: i32, %arg2: i32) -> (i32, i32) {
    %c0_i32 = arith.constant 0 : i32
    %c0_i32_0 = arith.constant 0 : i32
    return %arg0, %c0_i32 : i32, i32
  }
  func.func @transform_1(%arg0: i32, %arg1: i32, %arg2: i32) -> (i32, i32) {
    %c0_i32 = arith.constant 0 : i32
    %c0_i32_0 = arith.constant 0 : i32
    return %c0_i32, %arg2 : i32, i32
  }
  func.func @transform_2(%arg0: i32, %arg1: i32, %arg2: i32) -> (i32, i32) {
    %c0_i32 = arith.constant 0 : i32
    %c0_i32_0 = arith.constant 0 : i32
    return %c0_i32, %arg2 : i32, i32
  }
  func.func @transform_3(%arg0: i32, %arg1: i32, %arg2: i32) -> (i32, i32) {
    %0 = arith.muli %arg1, %arg2 : i32
    %c0_i32 = arith.constant 0 : i32
    return %arg0, %0 : i32, i32
  }
}

</mosaic_0001>

<llo_original>
// kernel: tpu_custom_call.1
$region0: #{tpu_custom_call.1}
  #allocation0 [shape = 'u32[]', space=smem, size = 0x4, offset = 0x4, fixed_abs, tag = 'smem constant byte address 0x4 - core index']
  #allocation1 [shape = 'u32[144,128]{1,0:T(1,128)}', space=vmem, size = 0x12000, scoped, tag = 'internal scratch']
  #allocation2 [shape = 'f32[16,1]{1,0:T(8,128)}', space=vmem, size = 0x2000, scoped, tag = 'scratch operand']
  #allocation3 [shape = 'f32[16,1]{1,0:T(8,128)}', space=vmem, size = 0x2000, scoped, tag = 'scratch operand']
  %s0 = inlined_call_operand.hbm [shape: f32[16,32], index: 0, kind: input, shape index: {}]
  %s1 = inlined_call_operand.hbm [shape: f32[32,128], index: 1, kind: input, shape index: {}]
  %s2 = inlined_call_operand.vmem [shape: f32[1,128], index: 2, kind: input, shape index: {}]
  %s3 = inlined_call_operand.hbm [shape: f32[16,128], index: 3, kind: output, shape index: {}]
  %s4 = sld [smem:[#allocation0]]
  $region65: #{tpu_custom_call.1} parent=0
    _
  %s6 = ssub.s32 1, %s4
  %s7 = scalar_select 0, %s6, %s4
  $region1: #{tpu_custom_call.1} parent=0
    #allocation4 [shape = 'u8[8192]{0}', space=vmem, size = 0x2000, scoped, tag = 'input window, operand 0, single buffered']
    #allocation5 [shape = 's32[2]{0}', space=sflag, size = 0x8, scoped, tag = 'scoped memory for tpu_custom_call.1']
    #allocation6 [shape = 's32[2]{0}', space=sflag, size = 0x8, scoped, tag = 'scoped memory for tpu_custom_call.1']
    #allocation7 [shape = 'u8[16384]{0}', space=vmem, size = 0x4000, scoped, tag = 'input window, operand 1, single buffered']
    #allocation8 [shape = 's32[1]{0}', space=sflag, size = 0x4, scoped, tag = 'scoped memory for tpu_custom_call.1']
    #allocation9 [shape = 'u8[16384]{0}', space=vmem, size = 0x4000, scoped, tag = 'output window, operand 0']
    %8 = vsyncpa [#allocation5], 0
    %9 = vsyncpa [#allocation8], 0
    %10 = vsyncpa [#allocation6], 0
    %s11 = scalar_lea.sflag [#allocation6], 1
    %12 = vsyncpa %s11, 0
    loop: start=0, step=1, limit=4
    $region2: #{tpu_custom_call.1} parent=1 // loop_pre_header
      _
    $region3: #{tpu_custom_call.1} parent=1 // loop_header
      %s14 = sphi 0, %s18
      %p15 = scmp.ge.s32.totalorder %s14, 4
      %s21 = sphi 0, %s40
      %s22 = sphi 0, %s36
      %s23 = sphi 0, %s32
      %s24 = sphi 0, %s21
      %s25 = sphi 0, %s22
      %s26 = sphi 0, %s23
      %s27 = sphi 0, %s24
      %s28 = sphi 0, %s25
      %s29 = sphi 0, %s26
      %s43 = sphi 0, %s45
      %s46 = sphi 0, %s43
      %s47 = sphi 0, %s46
      %s63 = sphi 0, %s47
      %s69 = sphi 0, %s71
      %s72 = sphi 0, %s69
      %s73 = sphi 0, %s72
      %s89 = sphi 0, %s73
      %s95 = sphi 0, %s97
      %s98 = sphi 0, %s95
      %s99 = sphi 0, %s98
      %s115 = sphi 0, %s99
      %s125 = sphi 0, %s127
      %s128 = sphi 0, %s125
      %s129 = sphi 0, %s128
      %s145 = sphi 0, %s129
    $region4: #{tpu_custom_call.1} parent=1 // loop_header_branch
      %17 = sbr.rel (%p15) target = $region8
    $region5: #{tpu_custom_call.1} parent=1 // loop_body
      %s19 = ssub.s32 %s14, 1
      %s20 = ssub.s32 %s14, 2
      %s30 = sadd.s32 1, %s23
      %p31 = scmp.ge.s32.totalorder %s30, 1
      %s32 = scalar_select %p31, 0, %s30
      %s33 = sadd.s32 1, %s22
      %s34 = scalar_select %p31, %s33, %s22
      %p35 = scmp.ge.s32.totalorder %s34, 2
      %s36 = scalar_select %p35, 0, %s34
      %s37 = sadd.s32 1, %s21
      %s38 = scalar_select %p35, %s37, %s21
      %p39 = scmp.ge.s32.totalorder %s38, 1
      %s40 = scalar_select %p39, 0, %s38
      %s41 = ssub.s32 %s21, %s40
      %p42 = scmp.eq.s32.totalorder %s41, 0
      %s44 = sadd.s32 %s43, 1
      %s45 = scalar_select %p42, %s43, %s44
      %p48 = pneg %p42
      %p49 = scmp.eq.s32.totalorder %s14, 1
      %p50 = por %p48, %p49
      %p51 = scmp.ne.s32.totalorder %s43, %s46
      %p52 = scmp.eq.s32.totalorder %s14, 0
      %p53 = por %p51, %p52
      %p54 = scmp.ne.s32.totalorder %s43, %s46
      %p55 = scmp.eq.s32.totalorder %s19, 1
      %p56 = por %p54, %p55
      %p57 = scmp.ne.s32.totalorder %s46, %s47
      %p58 = scmp.eq.s32.totalorder %s19, 0
      %p59 = por %p57, %p58
      %p60 = scmp.ne.s32.totalorder %s46, %s47
      %p61 = scmp.eq.s32.totalorder %s20, 1
      %p62 = por %p60, %p61
      %p64 = scmp.ne.s32.totalorder %s47, %s63
      %p65 = scmp.eq.s32.totalorder %s20, 0
      %p66 = por %p64, %p65
      %s67 = ssub.s32 %s23, %s32
      %p68 = scmp.eq.s32.totalorder %s67, 0
      %s70 = sadd.s32 %s69, 1
      %s71 = scalar_select %p68, %s69, %s70
      %p74 = pneg %p68
      %p75 = scmp.eq.s32.totalorder %s14, 1
      %p76 = por %p74, %p75
      %p77 = scmp.ne.s32.totalorder %s69, %s72
      %p78 = scmp.eq.s32.totalorder %s14, 0
      %p79 = por %p77, %p78
      %p80 = scmp.ne.s32.totalorder %s69, %s72
      %p81 = scmp.eq.s32.totalorder %s19, 1
      %p82 = por %p80, %p81
      %p83 = scmp.ne.s32.totalorder %s72, %s73
      %p84 = scmp.eq.s32.totalorder %s19, 0
      %p85 = por %p83, %p84
      %p86 = scmp.ne.s32.totalorder %s72, %s73
      %p87 = scmp.eq.s32.totalorder %s20, 1
      %p88 = por %p86, %p87
      %p90 = scmp.ne.s32.totalorder %s73, %s89
      %p91 = scmp.eq.s32.totalorder %s20, 0
      %p92 = por %p90, %p91
      %s93 = ssub.s32 %s23, %s32
      %p94 = scmp.eq.s32.totalorder %s93, 0
      %s96 = sadd.s32 %s95, 1
      %s97 = scalar_select %p94, %s95, %s96
      %p100 = pneg %p94
      %p101 = scmp.eq.s32.totalorder %s14, 1
      %p102 = por %p100, %p101
      %p103 = scmp.ne.s32.totalorder %s95, %s98
      %p104 = scmp.eq.s32.totalorder %s14, 0
      %p105 = por %p103, %p104
      %p106 = scmp.ne.s32.totalorder %s95, %s98
      %p107 = scmp.eq.s32.totalorder %s19, 1
      %p108 = por %p106, %p107
      %p109 = scmp.ne.s32.totalorder %s98, %s99
      %p110 = scmp.eq.s32.totalorder %s19, 0
      %p111 = por %p109, %p110
      %p112 = scmp.ne.s32.totalorder %s98, %s99
      %p113 = scmp.eq.s32.totalorder %s20, 1
      %p114 = por %p112, %p113
      %p116 = scmp.ne.s32.totalorder %s99, %s115
      %p117 = scmp.eq.s32.totalorder %s20, 0
      %p118 = por %p116, %p117
      %s119 = smul.u32 %s22, %s23
      %s120 = smul.u32 %s36, %s32
      %s121 = ssub.s32 %s21, %s40
      %s122 = ssub.s32 %s119, %s120
      %s123 = sor.u32 %s121, %s122
      %p124 = scmp.eq.s32.totalorder %s123, 0
      %s126 = sadd.s32 %s125, 1
      %s127 = scalar_select %p124, %s125, %s126
      %p130 = pneg %p124
      %p131 = scmp.eq.s32.totalorder %s14, 1
      %p132 = por %p130, %p131
      %p133 = scmp.ne.s32.totalorder %s125, %s128
      %p134 = scmp.eq.s32.totalorder %s14, 0
      %p135 = por %p133, %p134
      %p136 = scmp.ne.s32.totalorder %s125, %s128
      %p137 = scmp.eq.s32.totalorder %s19, 1
      %p138 = por %p136, %p137
      %p139 = scmp.ne.s32.totalorder %s128, %s129
      %p140 = scmp.eq.s32.totalorder %s19, 0
      %p141 = por %p139, %p140
      %p142 = scmp.ne.s32.totalorder %s128, %s129
      %p143 = scmp.eq.s32.totalorder %s20, 1
      %p144 = por %p142, %p143
      %p146 = scmp.ne.s32.totalorder %s129, %s145
      %p147 = scmp.eq.s32.totalorder %s20, 0
      %p148 = por %p146, %p147
      %p149 = scmp.le.s32.totalorder 1, %s14
      %p150 = scmp.lt.s32.totalorder %s14, 3
      %p151 = pnand %p149, %p150
      %p152 = pneg %p151
      // Predicated region
      $region9: #{tpu_custom_call.1} parent=5 // pred_check
        _
      $region10: #{tpu_custom_call.1} parent=5 // pred_check_branch
        %154 = sbr.rel (%p151) target = $region12
      $region11: #{tpu_custom_call.1} parent=5 // pred_region
        %s155 = ssub.s32 %s14, 1
        // Predicated region
        $region13: #{tpu_custom_call.1} parent=11 // pred_check
          %p156 = pneg %p59
        $region14: #{tpu_custom_call.1} parent=11 // pred_check_branch
          %158 = sbr.rel (%p156) target = $region16
        $region15: #{tpu_custom_call.1} parent=11 // pred_region
          %s159 = smul.u32 2, %s24
          %s161 = ssub.s32 256, 256
          %162 = vsyncadd [#allocation5], %s161
          %s163 = smul.addr %s159, 128
          %s164 = scalar_lea.hbm %s0, %s163
          %s165 = sshll.u32 [#allocation4], 4
          %s166 = int_to_ptr.vmem [resolvable:$true] %s165
          %171 = dma.hbm_to_vmem [thread:$0]  %s164, 256, %s166, [#allocation5], 128, 128, 8
        $region16: #{tpu_custom_call.1} parent=11 // pred_fallthru
          _
        // Predicated region
        $region17: #{tpu_custom_call.1} parent=11 // pred_check
          %p172 = pneg %p85
        $region18: #{tpu_custom_call.1} parent=11 // pred_check_branch
          %174 = sbr.rel (%p172) target = $region20
        $region19: #{tpu_custom_call.1} parent=11 // pred_region
          %s176 = ssub.s32 512, 512
          %177 = vsyncadd [#allocation8], %s176
          %s178 = smul.addr %s26, 128
          %s179 = scalar_lea.hbm %s1, %s178
          %s180 = sshll.u32 [#allocation7], 4
          %s181 = int_to_ptr.vmem [resolvable:$true] %s180
          %186 = dma.hbm_to_vmem [thread:$0]  %s179, 512, %s181, [#allocation8], 128, 128, 8
        $region20: #{tpu_custom_call.1} parent=11 // pred_fallthru
          _
        // Predicated region
        $region21: #{tpu_custom_call.1} parent=11 // pred_check
          %p187 = pneg %p111
        $region22: #{tpu_custom_call.1} parent=11 // pred_check_branch
          %189 = sbr.rel (%p187) target = $region24
        $region23: #{tpu_custom_call.1} parent=11 // pred_region
          %p190 = scmp.lt.s32.totalorder %s26, 0
          %s191 = scalar_select %p190, %s26, 0
          %s192 = scalar_lea.vmem %s2, %s191
        $region24: #{tpu_custom_call.1} parent=11 // pred_fallthru
          _
      $region12: #{tpu_custom_call.1} parent=5 // pred_fallthru
        _
      %p193 = scmp.lt.s32.totalorder %s14, 2
      // Predicated region
      $region25: #{tpu_custom_call.1} parent=5 // pred_check
        %p194 = pneg %p193
      $region26: #{tpu_custom_call.1} parent=5 // pred_check_branch
        %196 = sbr.rel (%p194) target = $region28
      $region27: #{tpu_custom_call.1} parent=5 // pred_region
        _
      $region28: #{tpu_custom_call.1} parent=5 // pred_fallthru
        _
      %p197 = scmp.le.s32.totalorder 1, %s14
      %p198 = scmp.lt.s32.totalorder %s14, 3
      %p199 = pnand %p197, %p198
      %p200 = pneg %p199
      // Predicated region
      $region29: #{tpu_custom_call.1} parent=5 // pred_check
        _
      $region30: #{tpu_custom_call.1} parent=5 // pred_check_branch
        %202 = sbr.rel (%p199) target = $region32
      $region31: #{tpu_custom_call.1} parent=5 // pred_region
        %s203 = ssub.s32 %s14, 1
        // Predicated region
        $region33: #{tpu_custom_call.1} parent=31 // pred_check
          %p204 = pneg %p59
        $region34: #{tpu_custom_call.1} parent=31 // pred_check_branch
          %206 = sbr.rel (%p204) target = $region36
        $region35: #{tpu_custom_call.1} parent=31 // pred_region
          %207 = dma.done [#allocation5], 256
        $region36: #{tpu_custom_call.1} parent=31 // pred_fallthru
          _
        // Predicated region
        $region37: #{tpu_custom_call.1} parent=31 // pred_check
          %p208 = pneg %p85
        $region38: #{tpu_custom_call.1} parent=31 // pred_check_branch
          %210 = sbr.rel (%p208) target = $region40
        $region39: #{tpu_custom_call.1} parent=31 // pred_region
          %211 = dma.done [#allocation8], 512
        $region40: #{tpu_custom_call.1} parent=31 // pred_fallthru
          _
        %p212 = pneg %p59
        %p213 = pneg %p56
        %p214 = pneg %p85
        %p215 = pneg %p82
        %p216 = scmp.lt.s32.totalorder %s26, 0
        %s217 = scalar_select %p216, %s26, 0
        %s218 = scalar_lea.vmem %s2, %s217
        %p219 = pneg %p111
        %p220 = pneg %p108
        %p221 = pneg %p141
        %p222 = pneg %p138
        %s223 = sand.u32 %s128, 1
        %s224 = scalar_lea.sflag [#allocation6], %s223
        %s225 = sand.u32 %s128, 1
        %s226 = smul.addr %s225, 16
        %s227 = scalar_lea.vmem [#allocation9], %s226
        %s228 = smul.u32 2, %s24
        %p229 = scmp.lt.s32.totalorder %s26, 0
        %s230 = scalar_select %p229, %s26, 0
        %s231 = scalar_lea.vmem %s2, %s230
        %s232 = smul.u32 %s25, %s26
        %s233 = smul.u32 2, %s24
        %p234 = scmp.eq.s32.totalorder %s25, 0
        %p235 = scmp.eq.s32.totalorder %s26, 0
        %p236 = pnand %p234, %p235
        %p237 = pneg %p236
        // Predicated region
        $region41: #{tpu_custom_call.1} parent=31 // pred_check
          _
        $region42: #{tpu_custom_call.1} parent=31 // pred_check_branch
          %239 = sbr.rel (%p236) target = $region44
        $region43: #{tpu_custom_call.1} parent=31 // pred_region
          %vm240 = vcmask 7168
          %241 = vst.msk [vmem:[#allocation2] sm:$0xff] %vm240, -1e+30
          %242 = vst.msk [vmem:[#allocation2 + $0x8] sm:$0xff] %vm240, -1e+30
          %243 = vst.msk [vmem:[#allocation3] sm:$0xff] %vm240, 0.0
          %244 = vst.msk [vmem:[#allocation3 + $0x8] sm:$0xff] %vm240, 0.0
        $region44: #{tpu_custom_call.1} parent=31 // pred_fallthru
          _
        %v245 = vld [vmem:[#allocation4] sm:$0xff]
        %v246 = vld [vmem:[#allocation4 + $0x8] sm:$0xff]
        %v247 = vld [vmem:[#allocation7] sm:$0xff]
        %v248 = vld [vmem:[#allocation7 + $0x8] sm:$0xff]
        %v249 = vld [vmem:[#allocation7 + $0x10] sm:$0xff]
        %v250 = vld [vmem:[#allocation7 + $0x18] sm:$0xff]
        %v251 = vld [vmem:[%s231] sm:$0x1]
        %v253 = vlaneseq
        %v254 = vshrl.u32 %v253, 7
        %v255 = vsub.s32 0, %v254
        %v256 = vrot.slane %v251, %v255
        %vm258 = vcmask 261120
        %v260 = vsel %vm258, %v245, 0
        %v263 = vsel %vm258, %v246, 0
        %265 = vmatprep.subr.mxu0 0.0
        %266 = vmatpush1.msra.mxu0 %v247
        %267 = vmatprep.subr.mxu0 0.0
        %268 = vmatpush1.msra.mxu0 %v248
        %269 = vmatprep.subr.mxu0 0.0
        %270 = vmatpush1.msra.mxu0 %v249
        %271 = vmatprep.subr.mxu0 0.0
        %272 = vmatpush1.msra.mxu0 %v250
        %273 = vmatprep.subr.mxu0 0.0
        %274 = vmatpush1.msra.mxu0 0.0
        %275 = vmatprep.subr.mxu0 0.0
        %276 = vmatpush1.msra.mxu0 0.0
        %277 = vmatprep.subr.mxu0 0.0
        %278 = vmatpush1.msra.mxu0 0.0
        %279 = vmatprep.subr.mxu0 0.0
        %280 = vmatpush1.msra.mxu0 0.0
        %281 = vmatprep.subr.mxu0 0.0
        %282 = vmatpush1.msra.mxu0 0.0
        %283 = vmatprep.subr.mxu0 0.0
        %284 = vmatpush1.msra.mxu0 0.0
        %285 = vmatprep.subr.mxu0 0.0
        %286 = vmatpush1.msra.mxu0 0.0
        %287 = vmatprep.subr.mxu0 0.0
        %288 = vmatpush1.msra.mxu0 0.0
        %289 = vmatprep.subr.mxu0 0.0
        %290 = vmatpush1.msra.mxu0 0.0
        %291 = vmatprep.subr.mxu0 0.0
        %292 = vmatpush1.msra.mxu0 0.0
        %293 = vmatprep.subr.mxu0 0.0
        %294 = vmatpush1.msra.mxu0 0.0
        %295 = vmatprep.subr.mxu0 0.0
        %296 = vmatpush1.msra.mxu0 0.0
        %297 = vmatprep.subr.mxu0 0.0
        %298 = vmatpush1.msra.mxu0 0.0
        %299 = vmatprep.subr.mxu0 0.0
        %300 = vmatpush1.msra.mxu0 0.0
        %301 = vmatprep.subr.mxu0 0.0
        %302 = vmatpush1.msra.mxu0 0.0
        %303 = vmatprep.subr.mxu0 0.0
        %304 = vmatpush1.msra.mxu0 0.0
        %305 = vmatprep.subr.mxu0 0.0
        %306 = vmatpush1.msra.mxu0 0.0
        %307 = vmatprep.subr.mxu0 0.0
        %308 = vmatpush1.msra.mxu0 0.0
        %309 = vmatprep.subr.mxu0 0.0
        %310 = vmatpush1.msra.mxu0 0.0
        %311 = vmatprep.subr.mxu0 0.0
        %312 = vmatpush1.msra.mxu0 0.0
        %313 = vmatprep.subr.mxu0 0.0
        %314 = vmatpush1.msra.mxu0 0.0
        %315 = vmatprep.subr.mxu0 0.0
        %316 = vmatpush1.msra.mxu0 0.0
        %317 = vmatprep.subr.mxu0 0.0
        %318 = vmatpush1.msra.mxu0 0.0
        %319 = vmatprep.subr.mxu0 0.0
        %320 = vmatpush1.msra.mxu0 0.0
        %321 = vmatprep.subr.mxu0 0.0
        %322 = vmatpush1.msra.mxu0 0.0
        %323 = vmatprep.subr.mxu0 0.0
        %324 = vmatpush1.msra.mxu0 0.0
        %325 = vmatprep.subr.mxu0 0.0
        %326 = vmatpush1.msra.mxu0 0.0
        %327 = vmatprep.subr.mxu0 0.0
        %328 = vmatpush1.msra.mxu0 0.0
        %329 = vmatprep.mubr.f32.mxu0 0.0
        %330 = vmatmul.mubr.f32.gmra.mrb[0].mxu0 %v260
        %v331 = vpop.f32.mrb[0].mxu0
        %v332 = vadd.f32 %v256, %v331
        %v333 = vpop.f32.mrb[0].mxu0
        %334 = vmatprep.mubr.f32.mxu0 0.0
        %335 = vmatmul.mubr.f32.gmra.mrb[0].mxu0 %v263
        %v336 = vpop.f32.mrb[0].mxu0
        %v337 = vadd.f32 %v256, %v336
        %v338 = vpop.f32.mrb[0].mxu0
        %339 = vdwg.mxu0
        // Predicated region
        $region45: #{tpu_custom_call.1} parent=31 // pred_check
          %p340 = pneg %p234
        $region46: #{tpu_custom_call.1} parent=31 // pred_check_branch
          %342 = sbr.rel (%p340) target = $region48
        $region47: #{tpu_custom_call.1} parent=31 // pred_region
          %v343 = vld [vmem:[#allocation2] sm:$0xff]
          %v344 = vld [vmem:[#allocation2 + $0x8] sm:$0xff]
          %345 = vmax.xlane.f32.xlu0 %v332
          %v346 = vpop.xlane.xlu0 %345
          %347 = vmax.xlane.f32.xlu0 %v337
          %v348 = vpop.xlane.xlu0 %347
          %v349 = vmax.f32 %v343, %v346
          %v350 = vmax.f32 %v344, %v348
          %v351 = vsub.f32 %v343, %v349
          %v352 = vsub.f32 %v344, %v350
          %v353 = vmul.f32 %v351, 1.442695
          %v354 = vpow.pop %v353
          %v355 = vmul.f32 %v352, 1.442695
          %v356 = vpow.pop %v355
          %v357 = vld [vmem:[#allocation3] sm:$0xff]
          %v358 = vld [vmem:[#allocation3 + $0x8] sm:$0xff]
          %v359 = vmul.f32 %v357, %v354
          %v360 = vmul.f32 %v358, %v356
          %362 = vset.pattern.permute.xlu0 0
          %363 = vperm.xlu0 %362, %v349
          %v364 = vpop.permute.xlu0 %363
          %367 = vset.pattern.permute.xlu0 0
          %368 = vperm.xlu0 %367, %v350
          %v369 = vpop.permute.xlu0 %368
          %v371 = vsub.f32 %v332, %v364
          %v372 = vsub.f32 %v337, %v369
          %v373 = vmul.f32 %v371, 1.442695
          %v374 = vpow.pop %v373
          %v375 = vmul.f32 %v372, 1.442695
          %v376 = vpow.pop %v375
          %377 = vadd.xlane.f32.xlu0 %v374
          %v378 = vpop.xlane.xlu0 %377
          %379 = vadd.xlane.f32.xlu0 %v376
          %v380 = vpop.xlane.xlu0 %379
          %v381 = vadd.f32 %v359, %v378
          %v382 = vadd.f32 %v360, %v380
          %vm383 = vcmask 7168
          %384 = vst.msk [vmem:[#allocation3] sm:$0xff] %vm383, %v381
          %385 = vst.msk [vmem:[#allocation3 + $0x8] sm:$0xff] %vm383, %v382
          %386 = vst.msk [vmem:[#allocation2] sm:$0xff] %vm383, %v349
          %387 = vst.msk [vmem:[#allocation2 + $0x8] sm:$0xff] %vm383, %v350
        $region48: #{tpu_custom_call.1} parent=31 // pred_fallthru
          _
        %p388 = scmp.eq.s32.totalorder %s25, 1
        // Predicated region
        $region49: #{tpu_custom_call.1} parent=31 // pred_check
          %p389 = pneg %p388
        $region50: #{tpu_custom_call.1} parent=31 // pred_check_branch
          %391 = sbr.rel (%p389) target = $region52
        $region51: #{tpu_custom_call.1} parent=31 // pred_region
          %v392 = vld [vmem:[#allocation2] sm:$0xff]
          %v393 = vld [vmem:[#allocation2 + $0x8] sm:$0xff]
          %v394 = vld [vmem:[#allocation3] sm:$0xff]
          %v395 = vld [vmem:[#allocation3 + $0x8] sm:$0xff]
          %v396 = vlog2.pop %v394
          %v397 = vmul.f32 %v396, 0.6931472
          %v398 = vlog2.pop %v395
          %v399 = vmul.f32 %v398, 0.6931472
          %v400 = vadd.f32 %v392, %v397
          %v401 = vadd.f32 %v393, %v399
          %403 = vset.pattern.permute.xlu0 0
          %404 = vperm.xlu0 %403, %v400
          %v405 = vpop.permute.xlu0 %404
          %408 = vset.pattern.permute.xlu0 0
          %409 = vperm.xlu0 %408, %v401
          %v410 = vpop.permute.xlu0 %409
          %v412 = vsub.f32 %v332, %v405
          %v413 = vsub.f32 %v337, %v410
          %414 = vst [vmem:[%s227] sm:$0xff] %v412
          %415 = vst [vmem:[%s227 + $0x8] sm:$0xff] %v413
        $region52: #{tpu_custom_call.1} parent=31 // pred_fallthru
          _
        %s416 = sand.u32 %s128, 1
        %s417 = scalar_lea.sflag [#allocation6], %s416
        %s418 = sand.u32 %s128, 1
        %s419 = smul.addr %s418, 16
        %s420 = scalar_lea.vmem [#allocation9], %s419
        // Predicated region
        $region53: #{tpu_custom_call.1} parent=31 // pred_check
          %p421 = pneg %p138
        $region54: #{tpu_custom_call.1} parent=31 // pred_check_branch
          %423 = sbr.rel (%p421) target = $region56
        $region55: #{tpu_custom_call.1} parent=31 // pred_region
          %s424 = smul.u32 %s25, %s26
          %s425 = smul.u32 2, %s24
          %s427 = ssub.s32 256, 256
          %428 = vsyncadd %s417, %s427
          %s429 = sadd.s32 %s424, %s425
          %s430 = smul.addr %s429, 128
          %s431 = scalar_lea.hbm %s3, %s430
          %s432 = sshll.u32 %s420, 4
          %s433 = int_to_ptr.vmem [resolvable:$true] %s432
          %438 = dma.vmem_to_hbm [thread:$0]  %s433, 256, %s431, %s417, 128, 128, 8
        $region56: #{tpu_custom_call.1} parent=31 // pred_fallthru
          _
      $region32: #{tpu_custom_call.1} parent=5 // pred_fallthru
        _
      %p439 = scmp.le.s32.totalorder 2, %s14
      // Predicated region
      $region57: #{tpu_custom_call.1} parent=5 // pred_check
        %p440 = pneg %p439
      $region58: #{tpu_custom_call.1} parent=5 // pred_check_branch
        %442 = sbr.rel (%p440) target = $region60
      $region59: #{tpu_custom_call.1} parent=5 // pred_region
        %s443 = ssub.s32 %s14, 2
        // Predicated region
        $region61: #{tpu_custom_call.1} parent=59 // pred_check
          %p444 = pneg %p144
        $region62: #{tpu_custom_call.1} parent=59 // pred_check_branch
          %446 = sbr.rel (%p444) target = $region64
        $region63: #{tpu_custom_call.1} parent=59 // pred_region
          %s447 = sand.u32 %s129, 1
          %s448 = scalar_lea.sflag [#allocation6], %s447
          %s449 = sand.u32 %s129, 1
          %s450 = smul.addr %s449, 16
          %s451 = scalar_lea.vmem [#allocation9], %s450
          %452 = dma.done %s448, 256
        $region64: #{tpu_custom_call.1} parent=59 // pred_fallthru
          _
      $region60: #{tpu_custom_call.1} parent=5 // pred_fallthru
        _
    $region6: #{tpu_custom_call.1} parent=1 // loop_footer
      %s18 = sadd.s32 1, %s14
    $region7: #{tpu_custom_call.1} parent=1 // loop_footer_branch
      %13 = sbr.rel target = $region3
    $region8: #{tpu_custom_call.1} parent=1 // loop_exit
      _
    %453 = vsyncpa [#allocation5], 1
    %s454 = scalar_lea.sflag [#allocation5], 1
    %455 = vsyncpa %s454, 1
    %456 = vsyncpa [#allocation8], 1
    %457 = vsyncpa [#allocation6], 1
    %s458 = scalar_lea.sflag [#allocation6], 1
    %459 = vsyncpa %s458, 1

</llo_original>
